<compile_context>
chip_gen: v6e
topology: v6e:2x2x1
jax: 0.10.0
libtpu: 0.0.40
codegen_flags: <defaults>
</compile_context>

<pallas_src>
import math

import numpy as np
import jax
import jax.numpy as jnp
from jax.experimental import pallas as pl
from jax.experimental.pallas import tpu as pltpu

SIZES = (1, 4, 12, 32)
_LANE = 128


def _round_up(x: int, m: int) -> int:
    return ((x + m - 1) // m) * m


def _adaptive_pool_membership(in_size: int, out_size: int) -> np.ndarray:
    """P[i, r] = 1 if input index r falls in adaptive-pool bin i else 0."""
    P = np.zeros((out_size, in_size), dtype=np.float32)
    for i in range(out_size):
        start = (i * in_size) // out_size                # floor
        end = -((-(i + 1) * in_size) // out_size)        # ceil
        P[i, start:end] = 1.0
    return P


def build_psp_matrix(H: int, W: int, sizes=SIZES):
    """Returns (0/1 membership M of shape (L, H*W), per-row scale 1/k of shape (L,))."""
    blocks, scales = [], []
    for s in sizes:
        Mh = _adaptive_pool_membership(H, s)   # (s, H)
        Mw = _adaptive_pool_membership(W, s)   # (s, W)
        # out row (i*s + j), col (r*W + w) -> Mh[i, r] * Mw[j, w] == kron(Mh, Mw)
        blocks.append(np.kron(Mh, Mw))
        counts = np.outer(Mh.sum(axis=1), Mw.sum(axis=1)).reshape(-1)
        scales.append(1.0 / counts)
    M = np.concatenate(blocks, axis=0).astype(np.float32)
    scale = np.concatenate(scales, axis=0).astype(np.float32)
    return M, scale


def _psp_kernel(mt_ref, scale_ref, x_ref, o_ref):
    # mt_ref:    (HW, L_pad)        0/1 membership, transposed (feats dtype)
    # scale_ref: (1, L_pad)         f32 per-output-bin 1/k normalization
    # x_ref:     (1, HW, C_TILE)    one (batch, channel-tile) slab of feats
    # o_ref:     (1, C_TILE, L_pad) lane-dense output (L on the lane dim)
    acc = jax.lax.dot_general(
        x_ref[0], mt_ref[...],
        dimension_numbers=(((0,), (0,)), ((), ())),   # x^T @ M^T on the MXU
        preferred_element_type=jnp.float32,
    )                                                 # (C_TILE, L_pad) f32
    o_ref[0] = (acc * scale_ref[...]).astype(o_ref.dtype)


def _pick_c_tile(c: int, cap: int) -> int:
    """Largest lane-aligned divisor of c that is <= cap (or full c)."""
    if c <= cap:
        return c
    t = (cap // _LANE) * _LANE
    while t >= _LANE:
        if c % t == 0:
            return t
        t -= _LANE
    return c


def psp_module(feats: jax.Array, sizes=SIZES, c_tile_cap: int = 512) -> jax.Array:
    """feats: (N, HW, C) -> (N, sum(s^2), C), matching PSPModule.forward."""
    n, hw, c = feats.shape
    H = math.isqrt(hw)
    assert H * H == hw, "hw must be a perfect square"
    W = H

    M, scale = build_psp_matrix(H, W, sizes)
    L = M.shape[0]
    L_pad = _round_up(L, _LANE)

    mt = np.zeros((hw, L_pad), dtype=np.float32)
    mt[:, :L] = M.T
    scale_pad = np.ones((1, L_pad), dtype=np.float32)
    scale_pad[0, :L] = scale

    dtype = feats.dtype
    mt_j = jnp.asarray(mt, dtype=dtype)    # 0/1 is exact in bf16 as well
    scale_j = jnp.asarray(scale_pad)       # normalization stays f32

    c_tile = _pick_c_tile(c, c_tile_cap)
    n_c_tiles = -(-c // c_tile)

    itemsize = jnp.dtype(dtype).itemsize
    vmem_need = (
        2 * hw * L_pad * itemsize          # M^T (constant block; budget 2x)
        + 2 * L_pad * 4                    # scale vector
        + 2 * hw * c_tile * itemsize       # double-buffered feats tile
        + 2 * c_tile * L_pad * itemsize    # double-buffered output tile
        + (2 << 20)                        # slack
    )
    vmem_limit = int(min(max(vmem_need, 16 << 20), 100 << 20))

    out_t = pl.pallas_call(
        _psp_kernel,
        out_shape=jax.ShapeDtypeStruct((n, c, L_pad), dtype),
        grid=(n, n_c_tiles),
        in_specs=[
            # constant block index -> M^T / scale stay resident, no per-step re-DMA
            pl.BlockSpec((hw, L_pad), lambda b, ci: (0, 0)),
            pl.BlockSpec((1, L_pad), lambda b, ci: (0, 0)),
            pl.BlockSpec((1, hw, c_tile), lambda b, ci: (b, 0, ci)),
        ],
        out_specs=pl.BlockSpec((1, c_tile, L_pad), lambda b, ci: (b, ci, 0)),
        compiler_params=pltpu.CompilerParams(
            dimension_semantics=("parallel", "parallel"),
            vmem_limit_bytes=vmem_limit,
        ),
    )(mt_j, scale_j, feats)

    # (N, C, L_pad) -> (N, L, C); padded rows sliced off.
    return jnp.transpose(out_t, (0, 2, 1))[:, :L, :]


def _reference_psp(feats: np.ndarray, sizes=SIZES) -> np.ndarray:
    """Pure-numpy reference reproducing the PyTorch forward exactly."""
    n, hw, c = feats.shape
    H = math.isqrt(hw)
    W = H
    x = feats.transpose(0, 2, 1).reshape(n, c, H, W)   # (n, c, H, W)
    priors = []
    for s in sizes:
        out = np.zeros((n, c, s, s), dtype=feats.dtype)
        for i in range(s):
            hs, he = (i * H) // s, -((-(i + 1) * H) // s)
            for j in range(s):
                ws, we = (j * W) // s, -((-(j + 1) * W) // s)
                out[:, :, i, j] = x[:, :, hs:he, ws:we].mean(axis=(2, 3))
        priors.append(out.reshape(n, c, s * s).transpose(0, 2, 1))
    return np.concatenate(priors, axis=1)


if __name__ == "__main__":
    key = jax.random.PRNGKey(0)
    n, H, W, c = 2, 16, 16, 32
    hw = H * W
    feats = jax.random.normal(key, (n, hw, c), dtype=jnp.float32)

    out = jax.block_until_ready(psp_module(feats))

    expected_L = sum(s * s for s in SIZES)   # 1 + 16 + 144 + 1024 = 1185
    assert out.shape == (n, expected_L, c), out.shape

    ref = _reference_psp(np.asarray(feats))
    np.testing.assert_allclose(np.asarray(out), ref, rtol=1e-5, atol=1e-5)

    # bf16 fast-MXU path: 0/1 membership stays exact in bf16, normalization
    # stays f32; only the activations are quantized.
    out_bf16 = jax.block_until_ready(psp_module(feats.astype(jnp.bfloat16)))
    np.testing.assert_allclose(
        np.asarray(out_bf16, dtype=np.float32), ref, rtol=5e-2, atol=5e-2
    )

    print("KERNEL_OK")
</pallas_src>

<mosaic_0001>
module attributes {stable_mosaic.version = 11 : i64} {
  func.func @_psp_kernel(%arg0: i32, %arg1: i32, %arg2: memref<256x1280xf32, #tpu.memory_space<vmem>>, %arg3: memref<1x1280xf32, #tpu.memory_space<vmem>>, %arg4: memref<1x256x32xf32, #tpu.memory_space<vmem>>, %arg5: memref<1x32x1280xf32, #tpu.memory_space<vmem>>) attributes {dimension_semantics = [#tpu.dimension_semantics<parallel>, #tpu.dimension_semantics<parallel>], iteration_bounds = array<i64: 2, 1>, scalar_prefetch = 0 : i64, scratch_operands = 0 : i64, tpu.core_type = #tpu.core_type<tc>, window_params = [{pipeline_mode = #tpu.pipeline_mode<synchronous>, transform_indices = @transform_0, window_bounds = array<i64: 256, 1280>}, {pipeline_mode = #tpu.pipeline_mode<synchronous>, transform_indices = @transform_1, window_bounds = array<i64: 1, 1280>}, {transform_indices = @transform_2, window_bounds = array<i64: 1, 256, 32>}, {transform_indices = @transform_3, window_bounds = array<i64: 1, 32, 1280>}]} {
    %c0 = arith.constant 0 : index
    %c0_0 = arith.constant 0 : index
    %c0_1 = arith.constant 0 : index
    %0 = vector.load %arg4[%c0, %c0_0, %c0_1] : memref<1x256x32xf32, #tpu.memory_space<vmem>>, vector<1x256x32xf32>
    %1 = vector.shape_cast %0 : vector<1x256x32xf32> to vector<256x32xf32>
    %c0_2 = arith.constant 0 : index
    %c0_3 = arith.constant 0 : index
    %2 = vector.load %arg2[%c0_2, %c0_3] : memref<256x1280xf32, #tpu.memory_space<vmem>>, vector<256x1280xf32>
    %cst = arith.constant dense<0.000000e+00> : vector<32x1280xf32>
    %3 = tpu.matmul %1, %2, %cst {dimension_numbers = #tpu.dot_dimension_numbers<[0], [0], [1], [1], [0, 1, 1, 1], [], []>} : vector<256x32xf32>, vector<256x1280xf32>, vector<32x1280xf32> -> vector<32x1280xf32>
    %c0_4 = arith.constant 0 : index
    %c0_5 = arith.constant 0 : index
    %4 = vector.load %arg3[%c0_4, %c0_5] : memref<1x1280xf32, #tpu.memory_space<vmem>>, vector<1x1280xf32>
    %5 = vector.broadcast %4 : vector<1x1280xf32> to vector<32x1280xf32>
    %6 = arith.mulf %3, %5 : vector<32x1280xf32>
    %c0_6 = arith.constant 0 : index
    %c0_7 = arith.constant 0 : index
    %c0_8 = arith.constant 0 : index
    %7 = vector.load %arg5[%c0_6, %c0_7, %c0_8] : memref<1x32x1280xf32, #tpu.memory_space<vmem>>, vector<1x32x1280xf32>
    %8 = vector.shape_cast %7 : vector<1x32x1280xf32> to vector<32x1280xf32>
    %9 = vector.shape_cast %6 : vector<32x1280xf32> to vector<1x32x1280xf32>
    tpu.vector_store %arg5[%c0_6, %c0_7, %c0_8], %9 {strides = array<i32>} : memref<1x32x1280xf32, #tpu.memory_space<vmem>>, vector<1x32x1280xf32>,
    return
  }
  func.func @transform_0(%arg0: i32, %arg1: i32) -> (i32, i32) {
    %c0_i32 = arith.constant 0 : i32
    %c0_i32_0 = arith.constant 0 : i32
    %c0_i32_1 = arith.constant 0 : i32
    return %c0_i32, %c0_i32_0 : i32, i32
  }
  func.func @transform_1(%arg0: i32, %arg1: i32) -> (i32, i32) {
    %c0_i32 = arith.constant 0 : i32
    %c0_i32_0 = arith.constant 0 : i32
    %c0_i32_1 = arith.constant 0 : i32
    return %c0_i32, %c0_i32_0 : i32, i32
  }
  func.func @transform_2(%arg0: i32, %arg1: i32) -> (i32, i32, i32) {
    %c0_i32 = arith.constant 0 : i32
    %c0_i32_0 = arith.constant 0 : i32
    return %arg0, %c0_i32, %arg1 : i32, i32, i32
  }
  func.func @transform_3(%arg0: i32, %arg1: i32) -> (i32, i32, i32) {
    %c0_i32 = arith.constant 0 : i32
    %c0_i32_0 = arith.constant 0 : i32
    return %arg0, %arg1, %c0_i32 : i32, i32, i32
  }
}

</mosaic_0001>

<llo_original>
// kernel: tpu_custom_call.1
$region0: #{tpu_custom_call.1}
  #allocation0 [shape = 'u32[]', space=smem, size = 0x4, offset = 0x4, fixed_abs, tag = 'smem constant byte address 0x4 - core index']
  #allocation1 [shape = 'u32[144,128]{1,0:T(1,128)}', space=vmem, size = 0x12000, scoped, tag = 'internal scratch']
  %s0 = inlined_call_operand.hbm [shape: f32[256,1280], index: 0, kind: input, shape index: {}]
  %s1 = inlined_call_operand.hbm [shape: f32[1,1280], index: 1, kind: input, shape index: {}]
  %s2 = inlined_call_operand.vmem [shape: f32[2,256,32], index: 2, kind: input, shape index: {}]
  %s3 = inlined_call_operand.hbm [shape: f32[2,32,1280], index: 3, kind: output, shape index: {}]
  %s4 = sld [smem:[#allocation0]]
  $region53: #{tpu_custom_call.1} parent=0
    _
  %s6 = ssub.s32 1, %s4
  %s7 = scalar_select 0, %s6, %s4
  $region1: #{tpu_custom_call.1} parent=0
    #allocation2 [shape = 'u8[1310720]{0}', space=vmem, size = 0x140000, scoped, tag = 'input window, operand 0, single buffered']
    #allocation3 [shape = 's32[2]{0}', space=sflag, size = 0x8, scoped, tag = 'scoped memory for tpu_custom_call.1']
    #allocation4 [shape = 's32[2]{0}', space=sflag, size = 0x8, scoped, tag = 'scoped memory for tpu_custom_call.1']
    #allocation5 [shape = 'u8[5120]{0}', space=vmem, size = 0x1400, scoped, tag = 'input window, operand 1, single buffered']
    #allocation6 [shape = 's32[1]{0}', space=sflag, size = 0x4, scoped, tag = 'scoped memory for tpu_custom_call.1']
    #allocation7 [shape = 'u8[327680]{0}', space=vmem, size = 0x50000, scoped, tag = 'output window, operand 0']
    %8 = vsyncpa [#allocation3], 0
    %9 = vsyncpa [#allocation6], 0
    %10 = vsyncpa [#allocation4], 0
    %s11 = scalar_lea.sflag [#allocation4], 1
    %12 = vsyncpa %s11, 0
    loop: start=0, step=1, limit=4
    $region2: #{tpu_custom_call.1} parent=1 // loop_pre_header
      _
    $region3: #{tpu_custom_call.1} parent=1 // loop_header
      %s14 = sphi 0, %s18
      %p15 = scmp.ge.s32.totalorder %s14, 4
      %s21 = sphi 0, %s33
      %s22 = sphi 0, %s29
      %s23 = sphi 0, %s21
      %s24 = sphi 0, %s22
      %s25 = sphi 0, %s23
      %s26 = sphi 0, %s24
      %s34 = sphi 0, %s34
      %s36 = sphi 0, %s34
      %s37 = sphi 0, %s36
      %s51 = sphi 0, %s37
      %s55 = sphi 0, %s55
      %s57 = sphi 0, %s55
      %s58 = sphi 0, %s57
      %s72 = sphi 0, %s58
      %s80 = sphi 0, %s82
      %s83 = sphi 0, %s80
      %s84 = sphi 0, %s83
      %s100 = sphi 0, %s84
      %s108 = sphi 0, %s110
      %s111 = sphi 0, %s108
      %s112 = sphi 0, %s111
      %s128 = sphi 0, %s112
    $region4: #{tpu_custom_call.1} parent=1 // loop_header_branch
      %17 = sbr.rel (%p15) target = $region8
    $region5: #{tpu_custom_call.1} parent=1 // loop_body
      %s19 = ssub.s32 %s14, 1
      %s20 = ssub.s32 %s14, 2
      %s27 = sadd.s32 1, %s22
      %p28 = scmp.ge.s32.totalorder %s27, 1
      %s29 = scalar_select %p28, 0, %s27
      %s30 = sadd.s32 1, %s21
      %s31 = scalar_select %p28, %s30, %s21
      %p32 = scmp.ge.s32.totalorder %s31, 2
      %s33 = scalar_select %p32, 0, %s31
      %s35 = sadd.s32 %s34, 1
      %p38 = scmp.eq.s32.totalorder %s14, 1
      %p39 = scmp.ne.s32.totalorder %s34, %s36
      %p40 = scmp.eq.s32.totalorder %s14, 0
      %p41 = por %p39, %p40
      %p42 = scmp.ne.s32.totalorder %s34, %s36
      %p43 = scmp.eq.s32.totalorder %s19, 1
      %p44 = por %p42, %p43
      %p45 = scmp.ne.s32.totalorder %s36, %s37
      %p46 = scmp.eq.s32.totalorder %s19, 0
      %p47 = por %p45, %p46
      %p48 = scmp.ne.s32.totalorder %s36, %s37
      %p49 = scmp.eq.s32.totalorder %s20, 1
      %p50 = por %p48, %p49
      %p52 = scmp.ne.s32.totalorder %s37, %s51
      %p53 = scmp.eq.s32.totalorder %s20, 0
      %p54 = por %p52, %p53
      %s56 = sadd.s32 %s55, 1
      %p59 = scmp.eq.s32.totalorder %s14, 1
      %p60 = scmp.ne.s32.totalorder %s55, %s57
      %p61 = scmp.eq.s32.totalorder %s14, 0
      %p62 = por %p60, %p61
      %p63 = scmp.ne.s32.totalorder %s55, %s57
      %p64 = scmp.eq.s32.totalorder %s19, 1
      %p65 = por %p63, %p64
      %p66 = scmp.ne.s32.totalorder %s57, %s58
      %p67 = scmp.eq.s32.totalorder %s19, 0
      %p68 = por %p66, %p67
      %p69 = scmp.ne.s32.totalorder %s57, %s58
      %p70 = scmp.eq.s32.totalorder %s20, 1
      %p71 = por %p69, %p70
      %p73 = scmp.ne.s32.totalorder %s58, %s72
      %p74 = scmp.eq.s32.totalorder %s20, 0
      %p75 = por %p73, %p74
      %s76 = ssub.s32 %s21, %s33
      %s77 = ssub.s32 %s22, %s29
      %s78 = sor.u32 %s76, %s77
      %p79 = scmp.eq.s32.totalorder %s78, 0
      %s81 = sadd.s32 %s80, 1
      %s82 = scalar_select %p79, %s80, %s81
      %p85 = pneg %p79
      %p86 = scmp.eq.s32.totalorder %s14, 1
      %p87 = por %p85, %p86
      %p88 = scmp.ne.s32.totalorder %s80, %s83
      %p89 = scmp.eq.s32.totalorder %s14, 0
      %p90 = por %p88, %p89
      %p91 = scmp.ne.s32.totalorder %s80, %s83
      %p92 = scmp.eq.s32.totalorder %s19, 1
      %p93 = por %p91, %p92
      %p94 = scmp.ne.s32.totalorder %s83, %s84
      %p95 = scmp.eq.s32.totalorder %s19, 0
      %p96 = por %p94, %p95
      %p97 = scmp.ne.s32.totalorder %s83, %s84
      %p98 = scmp.eq.s32.totalorder %s20, 1
      %p99 = por %p97, %p98
      %p101 = scmp.ne.s32.totalorder %s84, %s100
      %p102 = scmp.eq.s32.totalorder %s20, 0
      %p103 = por %p101, %p102
      %s104 = ssub.s32 %s21, %s33
      %s105 = ssub.s32 %s22, %s29
      %s106 = sor.u32 %s104, %s105
      %p107 = scmp.eq.s32.totalorder %s106, 0
      %s109 = sadd.s32 %s108, 1
      %s110 = scalar_select %p107, %s108, %s109
      %p113 = pneg %p107
      %p114 = scmp.eq.s32.totalorder %s14, 1
      %p115 = por %p113, %p114
      %p116 = scmp.ne.s32.totalorder %s108, %s111
      %p117 = scmp.eq.s32.totalorder %s14, 0
      %p118 = por %p116, %p117
      %p119 = scmp.ne.s32.totalorder %s108, %s111
      %p120 = scmp.eq.s32.totalorder %s19, 1
      %p121 = por %p119, %p120
      %p122 = scmp.ne.s32.totalorder %s111, %s112
      %p123 = scmp.eq.s32.totalorder %s19, 0
      %p124 = por %p122, %p123
      %p125 = scmp.ne.s32.totalorder %s111, %s112
      %p126 = scmp.eq.s32.totalorder %s20, 1
      %p127 = por %p125, %p126
      %p129 = scmp.ne.s32.totalorder %s112, %s128
      %p130 = scmp.eq.s32.totalorder %s20, 0
      %p131 = por %p129, %p130
      %p132 = scmp.le.s32.totalorder 1, %s14
      %p133 = scmp.lt.s32.totalorder %s14, 3
      %p134 = pnand %p132, %p133
      %p135 = pneg %p134
      // Predicated region
      $region9: #{tpu_custom_call.1} parent=5 // pred_check
        _
      $region10: #{tpu_custom_call.1} parent=5 // pred_check_branch
        %137 = sbr.rel (%p134) target = $region12
      $region11: #{tpu_custom_call.1} parent=5 // pred_region
        %s138 = ssub.s32 %s14, 1
        // Predicated region
        $region13: #{tpu_custom_call.1} parent=11 // pred_check
          %p139 = pneg %p47
        $region14: #{tpu_custom_call.1} parent=11 // pred_check_branch
          %141 = sbr.rel (%p139) target = $region16
        $region15: #{tpu_custom_call.1} parent=11 // pred_region
          %s143 = ssub.s32 40960, 40960
          %144 = vsyncadd [#allocation3], %s143
          %s145 = sshll.u32 [#allocation2], 4
          %s146 = int_to_ptr.vmem [resolvable:$true] %s145
          %151 = dma.hbm_to_vmem [thread:$0]  %s0, 40960, %s146, [#allocation3], 1280, 1280, 80
        $region16: #{tpu_custom_call.1} parent=11 // pred_fallthru
          _
        // Predicated region
        $region17: #{tpu_custom_call.1} parent=11 // pred_check
          %p152 = pneg %p68
        $region18: #{tpu_custom_call.1} parent=11 // pred_check_branch
          %154 = sbr.rel (%p152) target = $region20
        $region19: #{tpu_custom_call.1} parent=11 // pred_region
          %s156 = ssub.s32 160, 160
          %157 = vsyncadd [#allocation6], %s156
          %s159 = sshll.u32 [#allocation5], 4
          %s160 = int_to_ptr.vmem [resolvable:$true] %s159
          %162 = dma.hbm_to_vmem [thread:$0]  %s1, 160, %s160, [#allocation6]
        $region20: #{tpu_custom_call.1} parent=11 // pred_fallthru
          _
      $region12: #{tpu_custom_call.1} parent=5 // pred_fallthru
        _
      %p163 = scmp.lt.s32.totalorder %s14, 2
      // Predicated region
      $region21: #{tpu_custom_call.1} parent=5 // pred_check
        %p164 = pneg %p163
      $region22: #{tpu_custom_call.1} parent=5 // pred_check_branch
        %166 = sbr.rel (%p164) target = $region24
      $region23: #{tpu_custom_call.1} parent=5 // pred_region
        // Predicated region
        $region25: #{tpu_custom_call.1} parent=23 // pred_check
          %p167 = pneg %p90
        $region26: #{tpu_custom_call.1} parent=23 // pred_check_branch
          %169 = sbr.rel (%p167) target = $region28
        $region27: #{tpu_custom_call.1} parent=23 // pred_region
          %p170 = scmp.lt.s32.totalorder %s21, 1
          %s171 = scalar_select %p170, %s21, 1
          %p172 = scmp.lt.s32.totalorder %s22, 0
          %s173 = scalar_select %p172, %s22, 0
          %s174 = smul.addr %s171, 32
          %s175 = sadd.s32 %s173, %s174
          %s176 = smul.addr %s175, 8
          %s177 = scalar_lea.vmem %s2, %s176
        $region28: #{tpu_custom_call.1} parent=23 // pred_fallthru
          _
      $region24: #{tpu_custom_call.1} parent=5 // pred_fallthru
        _
      %p178 = scmp.le.s32.totalorder 1, %s14
      %p179 = scmp.lt.s32.totalorder %s14, 3
      %p180 = pnand %p178, %p179
      %p181 = pneg %p180
      // Predicated region
      $region29: #{tpu_custom_call.1} parent=5 // pred_check
        _
      $region30: #{tpu_custom_call.1} parent=5 // pred_check_branch
        %183 = sbr.rel (%p180) target = $region32
      $region31: #{tpu_custom_call.1} parent=5 // pred_region
        %s184 = ssub.s32 %s14, 1
        // Predicated region
        $region33: #{tpu_custom_call.1} parent=31 // pred_check
          %p185 = pneg %p47
        $region34: #{tpu_custom_call.1} parent=31 // pred_check_branch
          %187 = sbr.rel (%p185) target = $region36
        $region35: #{tpu_custom_call.1} parent=31 // pred_region
          %188 = dma.done [#allocation3], 40960
        $region36: #{tpu_custom_call.1} parent=31 // pred_fallthru
          _
        // Predicated region
        $region37: #{tpu_custom_call.1} parent=31 // pred_check
          %p189 = pneg %p68
        $region38: #{tpu_custom_call.1} parent=31 // pred_check_branch
          %191 = sbr.rel (%p189) target = $region40
        $region39: #{tpu_custom_call.1} parent=31 // pred_region
          %192 = dma.done [#allocation6], 160
        $region40: #{tpu_custom_call.1} parent=31 // pred_fallthru
          _
        %p193 = pneg %p47
        %p194 = pneg %p44
        %p195 = pneg %p68
        %p196 = pneg %p65
        %p197 = scmp.lt.s32.totalorder %s23, 1
        %s198 = scalar_select %p197, %s23, 1
        %p199 = scmp.lt.s32.totalorder %s24, 0
        %s200 = scalar_select %p199, %s24, 0
        %s201 = smul.addr %s198, 32
        %s202 = sadd.s32 %s200, %s201
        %s203 = smul.addr %s202, 8
        %s204 = scalar_lea.vmem %s2, %s203
        %p205 = pneg %p96
        %p206 = pneg %p93
        %p207 = pneg %p124
        %p208 = pneg %p121
        %s209 = sand.u32 %s111, 1
        %s210 = scalar_lea.sflag [#allocation4], %s209
        %s211 = sand.u32 %s111, 1
        %s212 = smul.addr %s211, 320
        %s213 = scalar_lea.vmem [#allocation7], %s212
        %p214 = scmp.lt.s32.totalorder %s23, 1
        %s215 = scalar_select %p214, %s23, 1
        %p216 = scmp.lt.s32.totalorder %s24, 0
        %s217 = scalar_select %p216, %s24, 0
        %s218 = smul.addr %s215, 32
        %s219 = sadd.s32 %s217, %s218
        %s220 = smul.addr %s219, 8
        %s221 = scalar_lea.vmem %s2, %s220
        %s222 = smul.u32 4, %s24
        %v223 = vld [vmem:[%s221] sm:$0xff]
        %v224 = vld [vmem:[%s221 + $0x8] sm:$0xff]
        %v225 = vld [vmem:[%s221 + $0x10] sm:$0xff]
        %v226 = vld [vmem:[%s221 + $0x18] sm:$0xff]
        %v227 = vld [vmem:[%s221 + $0x20] sm:$0xff]
        %v228 = vld [vmem:[%s221 + $0x28] sm:$0xff]
        %v229 = vld [vmem:[%s221 + $0x30] sm:$0xff]
        %v230 = vld [vmem:[%s221 + $0x38] sm:$0xff]
        %v231 = vld [vmem:[%s221 + $0x40] sm:$0xff]
        %v232 = vld [vmem:[%s221 + $0x48] sm:$0xff]
        %v233 = vld [vmem:[%s221 + $0x50] sm:$0xff]
        %v234 = vld [vmem:[%s221 + $0x58] sm:$0xff]
        %v235 = vld [vmem:[%s221 + $0x60] sm:$0xff]
        %v236 = vld [vmem:[%s221 + $0x68] sm:$0xff]
        %v237 = vld [vmem:[%s221 + $0x70] sm:$0xff]
        %v238 = vld [vmem:[%s221 + $0x78] sm:$0xff]
        %v239 = vld [vmem:[%s221 + $0x80] sm:$0xff]
        %v240 = vld [vmem:[%s221 + $0x88] sm:$0xff]
        %v241 = vld [vmem:[%s221 + $0x90] sm:$0xff]
        %v242 = vld [vmem:[%s221 + $0x98] sm:$0xff]
        %v243 = vld [vmem:[%s221 + $0xa0] sm:$0xff]
        %v244 = vld [vmem:[%s221 + $0xa8] sm:$0xff]
        %v245 = vld [vmem:[%s221 + $0xb0] sm:$0xff]
        %v246 = vld [vmem:[%s221 + $0xb8] sm:$0xff]
        %v247 = vld [vmem:[%s221 + $0xc0] sm:$0xff]
        %v248 = vld [vmem:[%s221 + $0xc8] sm:$0xff]
        %v249 = vld [vmem:[%s221 + $0xd0] sm:$0xff]
        %v250 = vld [vmem:[%s221 + $0xd8] sm:$0xff]
        %v251 = vld [vmem:[%s221 + $0xe0] sm:$0xff]
        %v252 = vld [vmem:[%s221 + $0xe8] sm:$0xff]
        %v253 = vld [vmem:[%s221 + $0xf0] sm:$0xff]
        %v254 = vld [vmem:[%s221 + $0xf8] sm:$0xff]
        %v255 = vld [vmem:[#allocation2] sm:$0xff]
        %v256 = vld [vmem:[#allocation2 + $0x8] sm:$0xff]
        %v257 = vld [vmem:[#allocation2 + $0x10] sm:$0xff]
        %v258 = vld [vmem:[#allocation2 + $0x18] sm:$0xff]
        %v259 = vld [vmem:[#allocation2 + $0x20] sm:$0xff]
        %v260 = vld [vmem:[#allocation2 + $0x28] sm:$0xff]
        %v261 = vld [vmem:[#allocation2 + $0x30] sm:$0xff]
        %v262 = vld [vmem:[#allocation2 + $0x38] sm:$0xff]
        %v263 = vld [vmem:[#allocation2 + $0x40] sm:$0xff]
        %v264 = vld [vmem:[#allocation2 + $0x48] sm:$0xff]
        %v265 = vld [vmem:[#allocation2 + $0x50] sm:$0xff]
        %v266 = vld [vmem:[#allocation2 + $0x58] sm:$0xff]
        %v267 = vld [vmem:[#allocation2 + $0x60] sm:$0xff]
        %v268 = vld [vmem:[#allocation2 + $0x68] sm:$0xff]
        %v269 = vld [vmem:[#allocation2 + $0x70] sm:$0xff]
        %v270 = vld [vmem:[#allocation2 + $0x78] sm:$0xff]
        %v271 = vld [vmem:[#allocation2 + $0x80] sm:$0xff]
        %v272 = vld [vmem:[#allocation2 + $0x88] sm:$0xff]
        %v273 = vld [vmem:[#allocation2 + $0x90] sm:$0xff]
        %v274 = vld [vmem:[#allocation2 + $0x98] sm:$0xff]
        %v275 = vld [vmem:[#allocation2 + $0xa0] sm:$0xff]
        %v276 = vld [vmem:[#allocation2 + $0xa8] sm:$0xff]
        %v277 = vld [vmem:[#allocation2 + $0xb0] sm:$0xff]
        %v278 = vld [vmem:[#allocation2 + $0xb8] sm:$0xff]
        %v279 = vld [vmem:[#allocation2 + $0xc0] sm:$0xff]
        %v280 = vld [vmem:[#allocation2 + $0xc8] sm:$0xff]
        %v281 = vld [vmem:[#allocation2 + $0xd0] sm:$0xff]
        %v282 = vld [vmem:[#allocation2 + $0xd8] sm:$0xff]
        %v283 = vld [vmem:[#allocation2 + $0xe0] sm:$0xff]
        %v284 = vld [vmem:[#allocation2 + $0xe8] sm:$0xff]
        %v285 = vld [vmem:[#allocation2 + $0xf0] sm:$0xff]
        %v286 = vld [vmem:[#allocation2 + $0xf8] sm:$0xff]
        %v287 = vld [vmem:[#allocation2 + $0x100] sm:$0xff]
        %v288 = vld [vmem:[#allocation2 + $0x108] sm:$0xff]
        %v289 = vld [vmem:[#allocation2 + $0x110] sm:$0xff]
        %v290 = vld [vmem:[#allocation2 + $0x118] sm:$0xff]
        %v291 = vld [vmem:[#allocation2 + $0x120] sm:$0xff]
        %v292 = vld [vmem:[#allocation2 + $0x128] sm:$0xff]
        %v293 = vld [vmem:[#allocation2 + $0x130] sm:$0xff]
        %v294 = vld [vmem:[#allocation2 + $0x138] sm:$0xff]
        %v295 = vld [vmem:[#allocation2 + $0x140] sm:$0xff]
        %v296 = vld [vmem:[#allocation2 + $0x148] sm:$0xff]
        %v297 = vld [vmem:[#allocation2 + $0x150] sm:$0xff]
        %v298 = vld [vmem:[#allocation2 + $0x158] sm:$0xff]
        %v299 = vld [vmem:[#allocation2 + $0x160] sm:$0xff]
        %v300 = vld [vmem:[#allocation2 + $0x168] sm:$0xff]
        %v301 = vld [vmem:[#allocation2 + $0x170] sm:$0xff]
        %v302 = vld [vmem:[#allocation2 + $0x178] sm:$0xff]
        %v303 = vld [vmem:[#allocation2 + $0x180] sm:$0xff]
        %v304 = vld [vmem:[#allocation2 + $0x188] sm:$0xff]
        %v305 = vld [vmem:[#allocation2 + $0x190] sm:$0xff]
        %v306 = vld [vmem:[#allocation2 + $0x198] sm:$0xff]
        %v307 = vld [vmem:[#allocation2 + $0x1a0] sm:$0xff]
        %v308 = vld [vmem:[#allocation2 + $0x1a8] sm:$0xff]
        %v309 = vld [vmem:[#allocation2 + $0x1b0] sm:$0xff]
        %v310 = vld [vmem:[#allocation2 + $0x1b8] sm:$0xff]
        %v311 = vld [vmem:[#allocation2 + $0x1c0] sm:$0xff]
        %v312 = vld [vmem:[#allocation2 + $0x1c8] sm:$0xff]
        %v313 = vld [vmem:[#allocation2 + $0x1d0] sm:$0xff]
        %v314 = vld [vmem:[#allocation2 + $0x1d8] sm:$0xff]
        %v315 = vld [vmem:[#allocation2 + $0x1e0] sm:$0xff]
        %v316 = vld [vmem:[#allocation2 + $0x1e8] sm:$0xff]
        %v317 = vld [vmem:[#allocation2 + $0x1f0] sm:$0xff]
        %v318 = vld [vmem:[#allocation2 + $0x1f8] sm:$0xff]
        %v319 = vld [vmem:[#allocation2 + $0x200] sm:$0xff]
        %v320 = vld [vmem:[#allocation2 + $0x208] sm:$0xff]
        %v321 = vld [vmem:[#allocation2 + $0x210] sm:$0xff]
        %v322 = vld [vmem:[#allocation2 + $0x218] sm:$0xff]
        %v323 = vld [vmem:[#allocation2 + $0x220] sm:$0xff]
        %v324 = vld [vmem:[#allocation2 + $0x228] sm:$0xff]
        %v325 = vld [vmem:[#allocation2 + $0x230] sm:$0xff]
        %v326 = vld [vmem:[#allocation2 + $0x238] sm:$0xff]
        %v327 = vld [vmem:[#allocation2 + $0x240] sm:$0xff]
        %v328 = vld [vmem:[#allocation2 + $0x248] sm:$0xff]
        %v329 = vld [vmem:[#allocation2 + $0x250] sm:$0xff]
        %v330 = vld [vmem:[#allocation2 + $0x258] sm:$0xff]
        %v331 = vld [vmem:[#allocation2 + $0x260] sm:$0xff]
        %v332 = vld [vmem:[#allocation2 + $0x268] sm:$0xff]
        %v333 = vld [vmem:[#allocation2 + $0x270] sm:$0xff]
        %v334 = vld [vmem:[#allocation2 + $0x278] sm:$0xff]
        %v335 = vld [vmem:[#allocation2 + $0x280] sm:$0xff]
        %v336 = vld [vmem:[#allocation2 + $0x288] sm:$0xff]
        %v337 = vld [vmem:[#allocation2 + $0x290] sm:$0xff]
        %v338 = vld [vmem:[#allocation2 + $0x298] sm:$0xff]
        %v339 = vld [vmem:[#allocation2 + $0x2a0] sm:$0xff]
        %v340 = vld [vmem:[#allocation2 + $0x2a8] sm:$0xff]
        %v341 = vld [vmem:[#allocation2 + $0x2b0] sm:$0xff]
        %v342 = vld [vmem:[#allocation2 + $0x2b8] sm:$0xff]
        %v343 = vld [vmem:[#allocation2 + $0x2c0] sm:$0xff]
        %v344 = vld [vmem:[#allocation2 + $0x2c8] sm:$0xff]
        %v345 = vld [vmem:[#allocation2 + $0x2d0] sm:$0xff]
        %v346 = vld [vmem:[#allocation2 + $0x2d8] sm:$0xff]
        %v347 = vld [vmem:[#allocation2 + $0x2e0] sm:$0xff]
        %v348 = vld [vmem:[#allocation2 + $0x2e8] sm:$0xff]
        %v349 = vld [vmem:[#allocation2 + $0x2f0] sm:$0xff]
        %v350 = vld [vmem:[#allocation2 + $0x2f8] sm:$0xff]
        %v351 = vld [vmem:[#allocation2 + $0x300] sm:$0xff]
        %v352 = vld [vmem:[#allocation2 + $0x308] sm:$0xff]
        %v353 = vld [vmem:[#allocation2 + $0x310] sm:$0xff]
        %v354 = vld [vmem:[#allocation2 + $0x318] sm:$0xff]
        %v355 = vld [vmem:[#allocation2 + $0x320] sm:$0xff]
        %v356 = vld [vmem:[#allocation2 + $0x328] sm:$0xff]
        %v357 = vld [vmem:[#allocation2 + $0x330] sm:$0xff]
        %v358 = vld [vmem:[#allocation2 + $0x338] sm:$0xff]
        %v359 = vld [vmem:[#allocation2 + $0x340] sm:$0xff]
        %v360 = vld [vmem:[#allocation2 + $0x348] sm:$0xff]
        %v361 = vld [vmem:[#allocation2 + $0x350] sm:$0xff]
        %v362 = vld [vmem:[#allocation2 + $0x358] sm:$0xff]
        %v363 = vld [vmem:[#allocation2 + $0x360] sm:$0xff]
        %v364 = vld [vmem:[#allocation2 + $0x368] sm:$0xff]
        %v365 = vld [vmem:[#allocation2 + $0x370] sm:$0xff]
        %v366 = vld [vmem:[#allocation2 + $0x378] sm:$0xff]
        %v367 = vld [vmem:[#allocation2 + $0x380] sm:$0xff]
        %v368 = vld [vmem:[#allocation2 + $0x388] sm:$0xff]
        %v369 = vld [vmem:[#allocation2 + $0x390] sm:$0xff]
        %v370 = vld [vmem:[#allocation2 + $0x398] sm:$0xff]
        %v371 = vld [vmem:[#allocation2 + $0x3a0] sm:$0xff]
        %v372 = vld [vmem:[#allocation2 + $0x3a8] sm:$0xff]
        %v373 = vld [vmem:[#allocation2 + $0x3b0] sm:$0xff]
        %v374 = vld [vmem:[#allocation2 + $0x3b8] sm:$0xff]
        %v375 = vld [vmem:[#allocation2 + $0x3c0] sm:$0xff]
        %v376 = vld [vmem:[#allocation2 + $0x3c8] sm:$0xff]
        %v377 = vld [vmem:[#allocation2 + $0x3d0] sm:$0xff]
        %v378 = vld [vmem:[#allocation2 + $0x3d8] sm:$0xff]
        %v379 = vld [vmem:[#allocation2 + $0x3e0] sm:$0xff]
        %v380 = vld [vmem:[#allocation2 + $0x3e8] sm:$0xff]
        %v381 = vld [vmem:[#allocation2 + $0x3f0] sm:$0xff]
        %v382 = vld [vmem:[#allocation2 + $0x3f8] sm:$0xff]
        %v383 = vld [vmem:[#allocation2 + $0x400] sm:$0xff]
        %v384 = vld [vmem:[#allocation2 + $0x408] sm:$0xff]
        %v385 = vld [vmem:[#allocation2 + $0x410] sm:$0xff]
        %v386 = vld [vmem:[#allocation2 + $0x418] sm:$0xff]
        %v387 = vld [vmem:[#allocation2 + $0x420] sm:$0xff]
        %v388 = vld [vmem:[#allocation2 + $0x428] sm:$0xff]
        %v389 = vld [vmem:[#allocation2 + $0x430] sm:$0xff]
        %v390 = vld [vmem:[#allocation2 + $0x438] sm:$0xff]
        %v391 = vld [vmem:[#allocation2 + $0x440] sm:$0xff]
        %v392 = vld [vmem:[#allocation2 + $0x448] sm:$0xff]
        %v393 = vld [vmem:[#allocation2 + $0x450] sm:$0xff]
        %v394 = vld [vmem:[#allocation2 + $0x458] sm:$0xff]
        %v395 = vld [vmem:[#allocation2 + $0x460] sm:$0xff]
        %v396 = vld [vmem:[#allocation2 + $0x468] sm:$0xff]
        %v397 = vld [vmem:[#allocation2 + $0x470] sm:$0xff]
        %v398 = vld [vmem:[#allocation2 + $0x478] sm:$0xff]
        %v399 = vld [vmem:[#allocation2 + $0x480] sm:$0xff]
        %v400 = vld [vmem:[#allocation2 + $0x488] sm:$0xff]
        %v401 = vld [vmem:[#allocation2 + $0x490] sm:$0xff]
        %v402 = vld [vmem:[#allocation2 + $0x498] sm:$0xff]
        %v403 = vld [vmem:[#allocation2 + $0x4a0] sm:$0xff]
        %v404 = vld [vmem:[#allocation2 + $0x4a8] sm:$0xff]
        %v405 = vld [vmem:[#allocation2 + $0x4b0] sm:$0xff]
        %v406 = vld [vmem:[#allocation2 + $0x4b8] sm:$0xff]
        %v407 = vld [vmem:[#allocation2 + $0x4c0] sm:$0xff]
        %v408 = vld [vmem:[#allocation2 + $0x4c8] sm:$0xff]
        %v409 = vld [vmem:[#allocation2 + $0x4d0] sm:$0xff]
        %v410 = vld [vmem:[#allocation2 + $0x4d8] sm:$0xff]
        %v411 = vld [vmem:[#allocation2 + $0x4e0] sm:$0xff]
        %v412 = vld [vmem:[#allocation2 + $0x4e8] sm:$0xff]
        %v413 = vld [vmem:[#allocation2 + $0x4f0] sm:$0xff]
        %v414 = vld [vmem:[#allocation2 + $0x4f8] sm:$0xff]
        %v415 = vld [vmem:[#allocation2 + $0x500] sm:$0xff]
        %v416 = vld [vmem:[#allocation2 + $0x508] sm:$0xff]
        %v417 = vld [vmem:[#allocation2 + $0x510] sm:$0xff]
        %v418 = vld [vmem:[#allocation2 + $0x518] sm:$0xff]
        %v419 = vld [vmem:[#allocation2 + $0x520] sm:$0xff]
        %v420 = vld [vmem:[#allocation2 + $0x528] sm:$0xff]
        %v421 = vld [vmem:[#allocation2 + $0x530] sm:$0xff]
        %v422 = vld [vmem:[#allocation2 + $0x538] sm:$0xff]
        %v423 = vld [vmem:[#allocation2 + $0x540] sm:$0xff]
        %v424 = vld [vmem:[#allocation2 + $0x548] sm:$0xff]
        %v425 = vld [vmem:[#allocation2 + $0x550] sm:$0xff]
        %v426 = vld [vmem:[#allocation2 + $0x558] sm:$0xff]
        %v427 = vld [vmem:[#allocation2 + $0x560] sm:$0xff]
        %v428 = vld [vmem:[#allocation2 + $0x568] sm:$0xff]
        %v429 = vld [vmem:[#allocation2 + $0x570] sm:$0xff]
        %v430 = vld [vmem:[#allocation2 + $0x578] sm:$0xff]
        %v431 = vld [vmem:[#allocation2 + $0x580] sm:$0xff]
        %v432 = vld [vmem:[#allocation2 + $0x588] sm:$0xff]
        %v433 = vld [vmem:[#allocation2 + $0x590] sm:$0xff]
        %v434 = vld [vmem:[#allocation2 + $0x598] sm:$0xff]
        %v435 = vld [vmem:[#allocation2 + $0x5a0] sm:$0xff]
        %v436 = vld [vmem:[#allocation2 + $0x5a8] sm:$0xff]
        %v437 = vld [vmem:[#allocation2 + $0x5b0] sm:$0xff]
        %v438 = vld [vmem:[#allocation2 + $0x5b8] sm:$0xff]
        %v439 = vld [vmem:[#allocation2 + $0x5c0] sm:$0xff]
        %v440 = vld [vmem:[#allocation2 + $0x5c8] sm:$0xff]
        %v441 = vld [vmem:[#allocation2 + $0x5d0] sm:$0xff]
        %v442 = vld [vmem:[#allocation2 + $0x5d8] sm:$0xff]
        %v443 = vld [vmem:[#allocation2 + $0x5e0] sm:$0xff]
        %v444 = vld [vmem:[#allocation2 + $0x5e8] sm:$0xff]
        %v445 = vld [vmem:[#allocation2 + $0x5f0] sm:$0xff]
        %v446 = vld [vmem:[#allocation2 + $0x5f8] sm:$0xff]
        %v447 = vld [vmem:[#allocation2 + $0x600] sm:$0xff]
        %v448 = vld [vmem:[#allocation2 + $0x608] sm:$0xff]
        %v449 = vld [vmem:[#allocation2 + $0x610] sm:$0xff]
        %v450 = vld [vmem:[#allocation2 + $0x618] sm:$0xff]
        %v451 = vld [vmem:[#allocation2 + $0x620] sm:$0xff]
        %v452 = vld [vmem:[#allocation2 + $0x628] sm:$0xff]
        %v453 = vld [vmem:[#allocation2 + $0x630] sm:$0xff]
        %v454 = vld [vmem:[#allocation2 + $0x638] sm:$0xff]
        %v455 = vld [vmem:[#allocation2 + $0x640] sm:$0xff]
        %v456 = vld [vmem:[#allocation2 + $0x648] sm:$0xff]
        %v457 = vld [vmem:[#allocation2 + $0x650] sm:$0xff]
        %v458 = vld [vmem:[#allocation2 + $0x658] sm:$0xff]
        %v459 = vld [vmem:[#allocation2 + $0x660] sm:$0xff]
        %v460 = vld [vmem:[#allocation2 + $0x668] sm:$0xff]
        %v461 = vld [vmem:[#allocation2 + $0x670] sm:$0xff]
        %v462 = vld [vmem:[#allocation2 + $0x678] sm:$0xff]
        %v463 = vld [vmem:[#allocation2 + $0x680] sm:$0xff]
        %v464 = vld [vmem:[#allocation2 + $0x688] sm:$0xff]
        %v465 = vld [vmem:[#allocation2 + $0x690] sm:$0xff]
        %v466 = vld [vmem:[#allocation2 + $0x698] sm:$0xff]
        %v467 = vld [vmem:[#allocation2 + $0x6a0] sm:$0xff]
        %v468 = vld [vmem:[#allocation2 + $0x6a8] sm:$0xff]
        %v469 = vld [vmem:[#allocation2 + $0x6b0] sm:$0xff]
        %v470 = vld [vmem:[#allocation2 + $0x6b8] sm:$0xff]
        %v471 = vld [vmem:[#allocation2 + $0x6c0] sm:$0xff]
        %v472 = vld [vmem:[#allocation2 + $0x6c8] sm:$0xff]
        %v473 = vld [vmem:[#allocation2 + $0x6d0] sm:$0xff]
        %v474 = vld [vmem:[#allocation2 + $0x6d8] sm:$0xff]
        %v475 = vld [vmem:[#allocation2 + $0x6e0] sm:$0xff]
        %v476 = vld [vmem:[#allocation2 + $0x6e8] sm:$0xff]
        %v477 = vld [vmem:[#allocation2 + $0x6f0] sm:$0xff]
        %v478 = vld [vmem:[#allocation2 + $0x6f8] sm:$0xff]
        %v479 = vld [vmem:[#allocation2 + $0x700] sm:$0xff]
        %v480 = vld [vmem:[#allocation2 + $0x708] sm:$0xff]
        %v481 = vld [vmem:[#allocation2 + $0x710] sm:$0xff]
        %v482 = vld [vmem:[#allocation2 + $0x718] sm:$0xff]
        %v483 = vld [vmem:[#allocation2 + $0x720] sm:$0xff]
        %v484 = vld [vmem:[#allocation2 + $0x728] sm:$0xff]
        %v485 = vld [vmem:[#allocation2 + $0x730] sm:$0xff]
        %v486 = vld [vmem:[#allocation2 + $0x738] sm:$0xff]
        %v487 = vld [vmem:[#allocation2 + $0x740] sm:$0xff]
        %v488 = vld [vmem:[#allocation2 + $0x748] sm:$0xff]
        %v489 = vld [vmem:[#allocation2 + $0x750] sm:$0xff]
        %v490 = vld [vmem:[#allocation2 + $0x758] sm:$0xff]
        %v491 = vld [vmem:[#allocation2 + $0x760] sm:$0xff]
        %v492 = vld [vmem:[#allocation2 + $0x768] sm:$0xff]
        %v493 = vld [vmem:[#allocation2 + $0x770] sm:$0xff]
        %v494 = vld [vmem:[#allocation2 + $0x778] sm:$0xff]
        %v495 = vld [vmem:[#allocation2 + $0x780] sm:$0xff]
        %v496 = vld [vmem:[#allocation2 + $0x788] sm:$0xff]
        %v497 = vld [vmem:[#allocation2 + $0x790] sm:$0xff]
        %v498 = vld [vmem:[#allocation2 + $0x798] sm:$0xff]
        %v499 = vld [vmem:[#allocation2 + $0x7a0] sm:$0xff]
        %v500 = vld [vmem:[#allocation2 + $0x7a8] sm:$0xff]
        %v501 = vld [vmem:[#allocation2 + $0x7b0] sm:$0xff]
        %v502 = vld [vmem:[#allocation2 + $0x7b8] sm:$0xff]
        %v503 = vld [vmem:[#allocation2 + $0x7c0] sm:$0xff]
        %v504 = vld [vmem:[#allocation2 + $0x7c8] sm:$0xff]
        %v505 = vld [vmem:[#allocation2 + $0x7d0] sm:$0xff]
        %v506 = vld [vmem:[#allocation2 + $0x7d8] sm:$0xff]
        %v507 = vld [vmem:[#allocation2 + $0x7e0] sm:$0xff]
        %v508 = vld [vmem:[#allocation2 + $0x7e8] sm:$0xff]
        %v509 = vld [vmem:[#allocation2 + $0x7f0] sm:$0xff]
        %v510 = vld [vmem:[#allocation2 + $0x7f8] sm:$0xff]
        %v511 = vld [vmem:[#allocation2 + $0x800] sm:$0xff]
        %v512 = vld [vmem:[#allocation2 + $0x808] sm:$0xff]
        %v513 = vld [vmem:[#allocation2 + $0x810] sm:$0xff]
        %v514 = vld [vmem:[#allocation2 + $0x818] sm:$0xff]
        %v515 = vld [vmem:[#allocation2 + $0x820] sm:$0xff]
        %v516 = vld [vmem:[#allocation2 + $0x828] sm:$0xff]
        %v517 = vld [vmem:[#allocation2 + $0x830] sm:$0xff]
        %v518 = vld [vmem:[#allocation2 + $0x838] sm:$0xff]
        %v519 = vld [vmem:[#allocation2 + $0x840] sm:$0xff]
        %v520 = vld [vmem:[#allocation2 + $0x848] sm:$0xff]
        %v521 = vld [vmem:[#allocation2 + $0x850] sm:$0xff]
        %v522 = vld [vmem:[#allocation2 + $0x858] sm:$0xff]
        %v523 = vld [vmem:[#allocation2 + $0x860] sm:$0xff]
        %v524 = vld [vmem:[#allocation2 + $0x868] sm:$0xff]
        %v525 = vld [vmem:[#allocation2 + $0x870] sm:$0xff]
        %v526 = vld [vmem:[#allocation2 + $0x878] sm:$0xff]
        %v527 = vld [vmem:[#allocation2 + $0x880] sm:$0xff]
        %v528 = vld [vmem:[#allocation2 + $0x888] sm:$0xff]
        %v529 = vld [vmem:[#allocation2 + $0x890] sm:$0xff]
        %v530 = vld [vmem:[#allocation2 + $0x898] sm:$0xff]
        %v531 = vld [vmem:[#allocation2 + $0x8a0] sm:$0xff]
        %v532 = vld [vmem:[#allocation2 + $0x8a8] sm:$0xff]
        %v533 = vld [vmem:[#allocation2 + $0x8b0] sm:$0xff]
        %v534 = vld [vmem:[#allocation2 + $0x8b8] sm:$0xff]
        %v535 = vld [vmem:[#allocation2 + $0x8c0] sm:$0xff]
        %v536 = vld [vmem:[#allocation2 + $0x8c8] sm:$0xff]
        %v537 = vld [vmem:[#allocation2 + $0x8d0] sm:$0xff]
        %v538 = vld [vmem:[#allocation2 + $0x8d8] sm:$0xff]
        %v539 = vld [vmem:[#allocation2 + $0x8e0] sm:$0xff]
        %v540 = vld [vmem:[#allocation2 + $0x8e8] sm:$0xff]
        %v541 = vld [vmem:[#allocation2 + $0x8f0] sm:$0xff]
        %v542 = vld [vmem:[#allocation2 + $0x8f8] sm:$0xff]
        %v543 = vld [vmem:[#allocation2 + $0x900] sm:$0xff]
        %v544 = vld [vmem:[#allocation2 + $0x908] sm:$0xff]
        %v545 = vld [vmem:[#allocation2 + $0x910] sm:$0xff]
        %v546 = vld [vmem:[#allocation2 + $0x918] sm:$0xff]
        %v547 = vld [vmem:[#allocation2 + $0x920] sm:$0xff]
        %v548 = vld [vmem:[#allocation2 + $0x928] sm:$0xff]
        %v549 = vld [vmem:[#allocation2 + $0x930] sm:$0xff]
        %v550 = vld [vmem:[#allocation2 + $0x938] sm:$0xff]
        %v551 = vld [vmem:[#allocation2 + $0x940] sm:$0xff]
        %v552 = vld [vmem:[#allocation2 + $0x948] sm:$0xff]
        %v553 = vld [vmem:[#allocation2 + $0x950] sm:$0xff]
        %v554 = vld [vmem:[#allocation2 + $0x958] sm:$0xff]
        %v555 = vld [vmem:[#allocation2 + $0x960] sm:$0xff]
        %v556 = vld [vmem:[#allocation2 + $0x968] sm:$0xff]
        %v557 = vld [vmem:[#allocation2 + $0x970] sm:$0xff]
        %v558 = vld [vmem:[#allocation2 + $0x978] sm:$0xff]
        %v559 = vld [vmem:[#allocation2 + $0x980] sm:$0xff]
        %v560 = vld [vmem:[#allocation2 + $0x988] sm:$0xff]
        %v561 = vld [vmem:[#allocation2 + $0x990] sm:$0xff]
        %v562 = vld [vmem:[#allocation2 + $0x998] sm:$0xff]
        %v563 = vld [vmem:[#allocation2 + $0x9a0] sm:$0xff]
        %v564 = vld [vmem:[#allocation2 + $0x9a8] sm:$0xff]
        %v565 = vld [vmem:[#allocation2 + $0x9b0] sm:$0xff]
        %v566 = vld [vmem:[#allocation2 + $0x9b8] sm:$0xff]
        %v567 = vld [vmem:[#allocation2 + $0x9c0] sm:$0xff]
        %v568 = vld [vmem:[#allocation2 + $0x9c8] sm:$0xff]
        %v569 = vld [vmem:[#allocation2 + $0x9d0] sm:$0xff]
        %v570 = vld [vmem:[#allocation2 + $0x9d8] sm:$0xff]
        %v571 = vld [vmem:[#allocation2 + $0x9e0] sm:$0xff]
        %v572 = vld [vmem:[#allocation2 + $0x9e8] sm:$0xff]
        %v573 = vld [vmem:[#allocation2 + $0x9f0] sm:$0xff]
        %v574 = vld [vmem:[#allocation2 + $0x9f8] sm:$0xff]
        %575 = vxpose.xlu0.b32.start [1/16] %v223, 128
        %576 = vxpose.xlu0.b32.cont [2/16] %v224, 128
        %577 = vxpose.xlu0.b32.cont [3/16] %v225, 128
        %578 = vxpose.xlu0.b32.cont [4/16] %v226, 128
        %579 = vxpose.xlu0.b32.cont [5/16] %v227, 128
        %580 = vxpose.xlu0.b32.cont [6/16] %v228, 128
        %581 = vxpose.xlu0.b32.cont [7/16] %v229, 128
        %582 = vxpose.xlu0.b32.cont [8/16] %v230, 128
        %583 = vxpose.xlu0.b32.cont [9/16] %v231, 128
        %584 = vxpose.xlu0.b32.cont [10/16] %v232, 128
        %585 = vxpose.xlu0.b32.cont [11/16] %v233, 128
        %586 = vxpose.xlu0.b32.cont [12/16] %v234, 128
        %587 = vxpose.xlu0.b32.cont [13/16] %v235, 128
        %588 = vxpose.xlu0.b32.cont [14/16] %v236, 128
        %589 = vxpose.xlu0.b32.cont [15/16] %v237, 128
        %590 = vxpose.xlu0.b32.end [16/16] %v238, 128
        %v591 = vpop.trf.xlu0
        %v592 = vpop.trf.xlu0
        %v593 = vpop.trf.xlu0
        %v594 = vpop.trf.xlu0
        %v595 = vpop.trf.xlu0
        %v596 = vpop.trf.xlu0
        %v597 = vpop.trf.xlu0
        %v598 = vpop.trf.xlu0
        %v599 = vpop.trf.xlu0
        %v600 = vpop.trf.xlu0
        %v601 = vpop.trf.xlu0
        %v602 = vpop.trf.xlu0
        %v603 = vpop.trf.xlu0
        %v604 = vpop.trf.xlu0
        %v605 = vpop.trf.xlu0
        %v606 = vpop.trf.xlu0
        %607 = vxpose.xlu0.b32.start [1/16] %v239, 128
        %608 = vxpose.xlu0.b32.cont [2/16] %v240, 128
        %609 = vxpose.xlu0.b32.cont [3/16] %v241, 128
        %610 = vxpose.xlu0.b32.cont [4/16] %v242, 128
        %611 = vxpose.xlu0.b32.cont [5/16] %v243, 128
        %612 = vxpose.xlu0.b32.cont [6/16] %v244, 128
        %613 = vxpose.xlu0.b32.cont [7/16] %v245, 128
        %614 = vxpose.xlu0.b32.cont [8/16] %v246, 128
        %615 = vxpose.xlu0.b32.cont [9/16] %v247, 128
        %616 = vxpose.xlu0.b32.cont [10/16] %v248, 128
        %617 = vxpose.xlu0.b32.cont [11/16] %v249, 128
        %618 = vxpose.xlu0.b32.cont [12/16] %v250, 128
        %619 = vxpose.xlu0.b32.cont [13/16] %v251, 128
        %620 = vxpose.xlu0.b32.cont [14/16] %v252, 128
        %621 = vxpose.xlu0.b32.cont [15/16] %v253, 128
        %622 = vxpose.xlu0.b32.end [16/16] %v254, 128
        %v623 = vpop.trf.xlu0
        %v624 = vpop.trf.xlu0
        %v625 = vpop.trf.xlu0
        %v626 = vpop.trf.xlu0
        %v627 = vpop.trf.xlu0
        %v628 = vpop.trf.xlu0
        %v629 = vpop.trf.xlu0
        %v630 = vpop.trf.xlu0
        %v631 = vpop.trf.xlu0
        %v632 = vpop.trf.xlu0
        %v633 = vpop.trf.xlu0
        %v634 = vpop.trf.xlu0
        %v635 = vpop.trf.xlu0
        %v636 = vpop.trf.xlu0
        %v637 = vpop.trf.xlu0
        %v638 = vpop.trf.xlu0
        %639 = vmatprep.subr.mxu0 %v406
        %640 = vmatpush1.msra.mxu0 %v405
        %641 = vmatprep.subr.mxu0 %v396
        %642 = vmatpush1.msra.mxu0 %v395
        %643 = vmatprep.subr.mxu0 %v386
        %644 = vmatpush1.msra.mxu0 %v385
        %645 = vmatprep.subr.mxu0 %v376
        %646 = vmatpush1.msra.mxu0 %v375
        %647 = vmatprep.subr.mxu0 %v366
        %648 = vmatpush1.msra.mxu0 %v365
        %649 = vmatprep.subr.mxu0 %v356
        %650 = vmatpush1.msra.mxu0 %v355
        %651 = vmatprep.subr.mxu0 %v346
        %652 = vmatpush1.msra.mxu0 %v345
        %653 = vmatprep.subr.mxu0 %v336
        %654 = vmatpush1.msra.mxu0 %v335
        %655 = vmatprep.subr.mxu0 %v326
        %656 = vmatpush1.msra.mxu0 %v325
        %657 = vmatprep.subr.mxu0 %v316
        %658 = vmatpush1.msra.mxu0 %v315
        %659 = vmatprep.subr.mxu0 %v306
        %660 = vmatpush1.msra.mxu0 %v305
        %661 = vmatprep.subr.mxu0 %v296
        %662 = vmatpush1.msra.mxu0 %v295
        %663 = vmatprep.subr.mxu0 %v286
        %664 = vmatpush1.msra.mxu0 %v285
        %665 = vmatprep.subr.mxu0 %v276
        %666 = vmatpush1.msra.mxu0 %v275
        %667 = vmatprep.subr.mxu0 %v266
        %668 = vmatpush1.msra.mxu0 %v265
        %669 = vmatprep.subr.mxu0 %v256
        %670 = vmatpush1.msra.mxu0 %v255
        %671 = vmatprep.subr.mxu0 %v566
        %672 = vmatpush2.msra.mxu0 %v565
        %673 = vmatprep.subr.mxu0 %v556
        %674 = vmatpush2.msra.mxu0 %v555
        %675 = vmatprep.subr.mxu0 %v546
        %676 = vmatpush2.msra.mxu0 %v545
        %677 = vmatprep.subr.mxu0 %v536
        %678 = vmatpush2.msra.mxu0 %v535
        %679 = vmatprep.subr.mxu0 %v526
        %680 = vmatpush2.msra.mxu0 %v525
        %681 = vmatprep.subr.mxu0 %v516
        %682 = vmatpush2.msra.mxu0 %v515
        %683 = vmatprep.subr.mxu0 %v506
        %684 = vmatpush2.msra.mxu0 %v505
        %685 = vmatprep.subr.mxu0 %v496
        %686 = vmatpush2.msra.mxu0 %v495
        %687 = vmatprep.subr.mxu0 %v486
        %688 = vmatpush2.msra.mxu0 %v485
        %689 = vmatprep.subr.mxu0 %v476
        %690 = vmatpush2.msra.mxu0 %v475
        %691 = vmatprep.subr.mxu0 %v466
        %692 = vmatpush2.msra.mxu0 %v465
        %693 = vmatprep.subr.mxu0 %v456
        %694 = vmatpush2.msra.mxu0 %v455
        %695 = vmatprep.subr.mxu0 %v446
        %696 = vmatpush2.msra.mxu0 %v445
        %697 = vmatprep.subr.mxu0 %v436
        %698 = vmatpush2.msra.mxu0 %v435
        %699 = vmatprep.subr.mxu0 %v426
        %700 = vmatpush2.msra.mxu0 %v425
        %701 = vmatprep.subr.mxu0 %v416
        %702 = vmatpush2.msra.mxu0 %v415
        %703 = vmatprep.mubr.f32.mxu0 %v623
        %704 = vmatmul.mubr.f32.gmra.mxu0 %v591
        %v705 = vpop.f32.mrf.mxu0
        %v706 = vadd.f32 0.0, %v705
        %v707 = vpop.f32.mrf.mxu0
        %v708 = vadd.f32 0.0, %v707
        %709 = vmatprep.mubr.f32.mxu0 %v624
        %710 = vmatmul.mubr.f32.gmra.mxu0 %v592
        %v711 = vpop.f32.mrf.mxu0
        %v712 = vadd.f32 0.0, %v711
        %v713 = vpop.f32.mrf.mxu0
        %v714 = vadd.f32 0.0, %v713
        %715 = vmatprep.mubr.f32.mxu0 %v625
        %716 = vmatmul.mubr.f32.gmra.mxu0 %v593
        %v717 = vpop.f32.mrf.mxu0
        %v718 = vadd.f32 0.0, %v717
        %v719 = vpop.f32.mrf.mxu0
        %v720 = vadd.f32 0.0, %v719
        %721 = vmatprep.mubr.f32.mxu0 %v626
        %722 = vmatmul.mubr.f32.gmra.mxu0 %v594
        %v723 = vpop.f32.mrf.mxu0
        %v724 = vadd.f32 0.0, %v723
        %v725 = vpop.f32.mrf.mxu0
        %v726 = vadd.f32 0.0, %v725
        %727 = vdwg.mxu0
        %728 = vmatprep.subr.mxu0 %v408
        %729 = vmatpush1.msra.mxu0 %v407
        %730 = vmatprep.subr.mxu0 %v398
        %731 = vmatpush1.msra.mxu0 %v397
        %732 = vmatprep.subr.mxu0 %v388
        %733 = vmatpush1.msra.mxu0 %v387
        %734 = vmatprep.subr.mxu0 %v378
        %735 = vmatpush1.msra.mxu0 %v377
        %736 = vmatprep.subr.mxu0 %v368
        %737 = vmatpush1.msra.mxu0 %v367
        %738 = vmatprep.subr.mxu0 %v358
        %739 = vmatpush1.msra.mxu0 %v357
        %740 = vmatprep.subr.mxu0 %v348
        %741 = vmatpush1.msra.mxu0 %v347
        %742 = vmatprep.subr.mxu0 %v338
        %743 = vmatpush1.msra.mxu0 %v337
        %744 = vmatprep.subr.mxu0 %v328
        %745 = vmatpush1.msra.mxu0 %v327
        %746 = vmatprep.subr.mxu0 %v318
        %747 = vmatpush1.msra.mxu0 %v317
        %748 = vmatprep.subr.mxu0 %v308
        %749 = vmatpush1.msra.mxu0 %v307
        %750 = vmatprep.subr.mxu0 %v298
        %751 = vmatpush1.msra.mxu0 %v297
        %752 = vmatprep.subr.mxu0 %v288
        %753 = vmatpush1.msra.mxu0 %v287
        %754 = vmatprep.subr.mxu0 %v278
        %755 = vmatpush1.msra.mxu0 %v277
        %756 = vmatprep.subr.mxu0 %v268
        %757 = vmatpush1.msra.mxu0 %v267
        %758 = vmatprep.subr.mxu0 %v258
        %759 = vmatpush1.msra.mxu0 %v257
        %760 = vmatprep.subr.mxu0 %v568
        %761 = vmatpush2.msra.mxu0 %v567
        %762 = vmatprep.subr.mxu0 %v558
        %763 = vmatpush2.msra.mxu0 %v557
        %764 = vmatprep.subr.mxu0 %v548
        %765 = vmatpush2.msra.mxu0 %v547
        %766 = vmatprep.subr.mxu0 %v538
        %767 = vmatpush2.msra.mxu0 %v537
        %768 = vmatprep.subr.mxu0 %v528
        %769 = vmatpush2.msra.mxu0 %v527
        %770 = vmatprep.subr.mxu0 %v518
        %771 = vmatpush2.msra.mxu0 %v517
        %772 = vmatprep.subr.mxu0 %v508
        %773 = vmatpush2.msra.mxu0 %v507
        %774 = vmatprep.subr.mxu0 %v498
        %775 = vmatpush2.msra.mxu0 %v497
        %776 = vmatprep.subr.mxu0 %v488
        %777 = vmatpush2.msra.mxu0 %v487
        %778 = vmatprep.subr.mxu0 %v478
        %779 = vmatpush2.msra.mxu0 %v477
        %780 = vmatprep.subr.mxu0 %v468
        %781 = vmatpush2.msra.mxu0 %v467
        %782 = vmatprep.subr.mxu0 %v458
        %783 = vmatpush2.msra.mxu0 %v457
        %784 = vmatprep.subr.mxu0 %v448
        %785 = vmatpush2.msra.mxu0 %v447
        %786 = vmatprep.subr.mxu0 %v438
        %787 = vmatpush2.msra.mxu0 %v437
        %788 = vmatprep.subr.mxu0 %v428
        %789 = vmatpush2.msra.mxu0 %v427
        %790 = vmatprep.subr.mxu0 %v418
        %791 = vmatpush2.msra.mxu0 %v417
        %792 = vmatprep.mubr.f32.mxu0 %v623
        %793 = vmatmul.mubr.f32.gmra.mxu0 %v591
        %v794 = vpop.f32.mrf.mxu0
        %v795 = vadd.f32 0.0, %v794
        %v796 = vpop.f32.mrf.mxu0
        %v797 = vadd.f32 0.0, %v796
        %798 = vmatprep.mubr.f32.mxu0 %v624
        %799 = vmatmul.mubr.f32.gmra.mxu0 %v592
        %v800 = vpop.f32.mrf.mxu0
        %v801 = vadd.f32 0.0, %v800
        %v802 = vpop.f32.mrf.mxu0
        %v803 = vadd.f32 0.0, %v802
        %804 = vmatprep.mubr.f32.mxu0 %v625
        %805 = vmatmul.mubr.f32.gmra.mxu0 %v593
        %v806 = vpop.f32.mrf.mxu0
        %v807 = vadd.f32 0.0, %v806
        %v808 = vpop.f32.mrf.mxu0
        %v809 = vadd.f32 0.0, %v808
        %810 = vmatprep.mubr.f32.mxu0 %v626
        %811 = vmatmul.mubr.f32.gmra.mxu0 %v594
        %v812 = vpop.f32.mrf.mxu0
        %v813 = vadd.f32 0.0, %v812
        %v814 = vpop.f32.mrf.mxu0
        %v815 = vadd.f32 0.0, %v814
        %816 = vdwg.mxu0
        %817 = vmatprep.subr.mxu0 %v410
        %818 = vmatpush1.msra.mxu0 %v409
        %819 = vmatprep.subr.mxu0 %v400
        %820 = vmatpush1.msra.mxu0 %v399
        %821 = vmatprep.subr.mxu0 %v390
        %822 = vmatpush1.msra.mxu0 %v389
        %823 = vmatprep.subr.mxu0 %v380
        %824 = vmatpush1.msra.mxu0 %v379
        %825 = vmatprep.subr.mxu0 %v370
        %826 = vmatpush1.msra.mxu0 %v369
        %827 = vmatprep.subr.mxu0 %v360
        %828 = vmatpush1.msra.mxu0 %v359
        %829 = vmatprep.subr.mxu0 %v350
        %830 = vmatpush1.msra.mxu0 %v349
        %831 = vmatprep.subr.mxu0 %v340
        %832 = vmatpush1.msra.mxu0 %v339
        %833 = vmatprep.subr.mxu0 %v330
        %834 = vmatpush1.msra.mxu0 %v329
        %835 = vmatprep.subr.mxu0 %v320
        %836 = vmatpush1.msra.mxu0 %v319
        %837 = vmatprep.subr.mxu0 %v310
        %838 = vmatpush1.msra.mxu0 %v309
        %839 = vmatprep.subr.mxu0 %v300
        %840 = vmatpush1.msra.mxu0 %v299
        %841 = vmatprep.subr.mxu0 %v290
        %842 = vmatpush1.msra.mxu0 %v289
        %843 = vmatprep.subr.mxu0 %v280
        %844 = vmatpush1.msra.mxu0 %v279
        %845 = vmatprep.subr.mxu0 %v270
        %846 = vmatpush1.msra.mxu0 %v269
        %847 = vmatprep.subr.mxu0 %v260
        %848 = vmatpush1.msra.mxu0 %v259
        %849 = vmatprep.subr.mxu0 %v570
        %850 = vmatpush2.msra.mxu0 %v569
        %851 = vmatprep.subr.mxu0 %v560
        %852 = vmatpush2.msra.mxu0 %v559
        %853 = vmatprep.subr.mxu0 %v550
        %854 = vmatpush2.msra.mxu0 %v549
        %855 = vmatprep.subr.mxu0 %v540
        %856 = vmatpush2.msra.mxu0 %v539
        %857 = vmatprep.subr.mxu0 %v530
        %858 = vmatpush2.msra.mxu0 %v529
        %859 = vmatprep.subr.mxu0 %v520
        %860 = vmatpush2.msra.mxu0 %v519
        %861 = vmatprep.subr.mxu0 %v510
        %862 = vmatpush2.msra.mxu0 %v509
        %863 = vmatprep.subr.mxu0 %v500
        %864 = vmatpush2.msra.mxu0 %v499
        %865 = vmatprep.subr.mxu0 %v490
        %866 = vmatpush2.msra.mxu0 %v489
        %867 = vmatprep.subr.mxu0 %v480
        %868 = vmatpush2.msra.mxu0 %v479
        %869 = vmatprep.subr.mxu0 %v470
        %870 = vmatpush2.msra.mxu0 %v469
        %871 = vmatprep.subr.mxu0 %v460
        %872 = vmatpush2.msra.mxu0 %v459
        %873 = vmatprep.subr.mxu0 %v450
        %874 = vmatpush2.msra.mxu0 %v449
        %875 = vmatprep.subr.mxu0 %v440
        %876 = vmatpush2.msra.mxu0 %v439
        %877 = vmatprep.subr.mxu0 %v430
        %878 = vmatpush2.msra.mxu0 %v429
        %879 = vmatprep.subr.mxu0 %v420
        %880 = vmatpush2.msra.mxu0 %v419
        %881 = vmatprep.mubr.f32.mxu0 %v623
        %882 = vmatmul.mubr.f32.gmra.mxu0 %v591
        %v883 = vpop.f32.mrf.mxu0
        %v884 = vadd.f32 0.0, %v883
        %v885 = vpop.f32.mrf.mxu0
        %v886 = vadd.f32 0.0, %v885
        %887 = vmatprep.mubr.f32.mxu0 %v624
        %888 = vmatmul.mubr.f32.gmra.mxu0 %v592
        %v889 = vpop.f32.mrf.mxu0
        %v890 = vadd.f32 0.0, %v889
        %v891 = vpop.f32.mrf.mxu0
        %v892 = vadd.f32 0.0, %v891
        %893 = vmatprep.mubr.f32.mxu0 %v625
        %894 = vmatmul.mubr.f32.gmra.mxu0 %v593
        %v895 = vpop.f32.mrf.mxu0
        %v896 = vadd.f32 0.0, %v895
        %v897 = vpop.f32.mrf.mxu0
        %v898 = vadd.f32 0.0, %v897
        %899 = vmatprep.mubr.f32.mxu0 %v626
        %900 = vmatmul.mubr.f32.gmra.mxu0 %v594
        %v901 = vpop.f32.mrf.mxu0
        %v902 = vadd.f32 0.0, %v901
        %v903 = vpop.f32.mrf.mxu0
        %v904 = vadd.f32 0.0, %v903
        %905 = vdwg.mxu0
        %906 = vmatprep.subr.mxu0 %v412
        %907 = vmatpush1.msra.mxu0 %v411
        %908 = vmatprep.subr.mxu0 %v402
        %909 = vmatpush1.msra.mxu0 %v401
        %910 = vmatprep.subr.mxu0 %v392
        %911 = vmatpush1.msra.mxu0 %v391
        %912 = vmatprep.subr.mxu0 %v382
        %913 = vmatpush1.msra.mxu0 %v381
        %914 = vmatprep.subr.mxu0 %v372
        %915 = vmatpush1.msra.mxu0 %v371
        %916 = vmatprep.subr.mxu0 %v362
        %917 = vmatpush1.msra.mxu0 %v361
        %918 = vmatprep.subr.mxu0 %v352
        %919 = vmatpush1.msra.mxu0 %v351
        %920 = vmatprep.subr.mxu0 %v342
        %921 = vmatpush1.msra.mxu0 %v341
        %922 = vmatprep.subr.mxu0 %v332
        %923 = vmatpush1.msra.mxu0 %v331
        %924 = vmatprep.subr.mxu0 %v322
        %925 = vmatpush1.msra.mxu0 %v321
        %926 = vmatprep.subr.mxu0 %v312
        %927 = vmatpush1.msra.mxu0 %v311
        %928 = vmatprep.subr.mxu0 %v302
        %929 = vmatpush1.msra.mxu0 %v301
        %930 = vmatprep.subr.mxu0 %v292
        %931 = vmatpush1.msra.mxu0 %v291
        %932 = vmatprep.subr.mxu0 %v282
        %933 = vmatpush1.msra.mxu0 %v281
        %934 = vmatprep.subr.mxu0 %v272
        %935 = vmatpush1.msra.mxu0 %v271
        %936 = vmatprep.subr.mxu0 %v262
        %937 = vmatpush1.msra.mxu0 %v261
        %938 = vmatprep.subr.mxu0 %v572
        %939 = vmatpush2.msra.mxu0 %v571
        %940 = vmatprep.subr.mxu0 %v562
        %941 = vmatpush2.msra.mxu0 %v561
        %942 = vmatprep.subr.mxu0 %v552
        %943 = vmatpush2.msra.mxu0 %v551
        %944 = vmatprep.subr.mxu0 %v542
        %945 = vmatpush2.msra.mxu0 %v541
        %946 = vmatprep.subr.mxu0 %v532
        %947 = vmatpush2.msra.mxu0 %v531
        %948 = vmatprep.subr.mxu0 %v522
        %949 = vmatpush2.msra.mxu0 %v521
        %950 = vmatprep.subr.mxu0 %v512
        %951 = vmatpush2.msra.mxu0 %v511
        %952 = vmatprep.subr.mxu0 %v502
        %953 = vmatpush2.msra.mxu0 %v501
        %954 = vmatprep.subr.mxu0 %v492
        %955 = vmatpush2.msra.mxu0 %v491
        %956 = vmatprep.subr.mxu0 %v482
        %957 = vmatpush2.msra.mxu0 %v481
        %958 = vmatprep.subr.mxu0 %v472
        %959 = vmatpush2.msra.mxu0 %v471
        %960 = vmatprep.subr.mxu0 %v462
        %961 = vmatpush2.msra.mxu0 %v461
        %962 = vmatprep.subr.mxu0 %v452
        %963 = vmatpush2.msra.mxu0 %v451
        %964 = vmatprep.subr.mxu0 %v442
        %965 = vmatpush2.msra.mxu0 %v441
        %966 = vmatprep.subr.mxu0 %v432
        %967 = vmatpush2.msra.mxu0 %v431
        %968 = vmatprep.subr.mxu0 %v422
        %969 = vmatpush2.msra.mxu0 %v421
        %970 = vmatprep.mubr.f32.mxu0 %v623
        %971 = vmatmul.mubr.f32.gmra.mxu0 %v591
        %v972 = vpop.f32.mrf.mxu0
        %v973 = vadd.f32 0.0, %v972
        %v974 = vpop.f32.mrf.mxu0
        %v975 = vadd.f32 0.0, %v974
        %976 = vmatprep.mubr.f32.mxu0 %v624
        %977 = vmatmul.mubr.f32.gmra.mxu0 %v592
        %v978 = vpop.f32.mrf.mxu0
        %v979 = vadd.f32 0.0, %v978
        %v980 = vpop.f32.mrf.mxu0
        %v981 = vadd.f32 0.0, %v980
        %982 = vmatprep.mubr.f32.mxu0 %v625
        %983 = vmatmul.mubr.f32.gmra.mxu0 %v593
        %v984 = vpop.f32.mrf.mxu0
        %v985 = vadd.f32 0.0, %v984
        %v986 = vpop.f32.mrf.mxu0
        %v987 = vadd.f32 0.0, %v986
        %988 = vmatprep.mubr.f32.mxu0 %v626
        %989 = vmatmul.mubr.f32.gmra.mxu0 %v594
        %v990 = vpop.f32.mrf.mxu0
        %v991 = vadd.f32 0.0, %v990
        %v992 = vpop.f32.mrf.mxu0
        %v993 = vadd.f32 0.0, %v992
        %994 = vdwg.mxu0
        %995 = vmatprep.subr.mxu0 %v414
        %996 = vmatpush1.msra.mxu0 %v413
        %997 = vmatprep.subr.mxu0 %v404
        %998 = vmatpush1.msra.mxu0 %v403
        %999 = vmatprep.subr.mxu0 %v394
        %1000 = vmatpush1.msra.mxu0 %v393
        %1001 = vmatprep.subr.mxu0 %v384
        %1002 = vmatpush1.msra.mxu0 %v383
        %1003 = vmatprep.subr.mxu0 %v374
        %1004 = vmatpush1.msra.mxu0 %v373
        %1005 = vmatprep.subr.mxu0 %v364
        %1006 = vmatpush1.msra.mxu0 %v363
        %1007 = vmatprep.subr.mxu0 %v354
        %1008 = vmatpush1.msra.mxu0 %v353
        %1009 = vmatprep.subr.mxu0 %v344
        %1010 = vmatpush1.msra.mxu0 %v343
        %1011 = vmatprep.subr.mxu0 %v334
        %1012 = vmatpush1.msra.mxu0 %v333
        %1013 = vmatprep.subr.mxu0 %v324
        %1014 = vmatpush1.msra.mxu0 %v323
        %1015 = vmatprep.subr.mxu0 %v314
        %1016 = vmatpush1.msra.mxu0 %v313
        %1017 = vmatprep.subr.mxu0 %v304
        %1018 = vmatpush1.msra.mxu0 %v303
        %1019 = vmatprep.subr.mxu0 %v294
        %1020 = vmatpush1.msra.mxu0 %v293
        %1021 = vmatprep.subr.mxu0 %v284
        %1022 = vmatpush1.msra.mxu0 %v283
        %1023 = vmatprep.subr.mxu0 %v274
        %1024 = vmatpush1.msra.mxu0 %v273
        %1025 = vmatprep.subr.mxu0 %v264
        %1026 = vmatpush1.msra.mxu0 %v263
        %1027 = vmatprep.subr.mxu0 %v574
        %1028 = vmatpush2.msra.mxu0 %v573
        %1029 = vmatprep.subr.mxu0 %v564
        %1030 = vmatpush2.msra.mxu0 %v563
        %1031 = vmatprep.subr.mxu0 %v554
        %1032 = vmatpush2.msra.mxu0 %v553
        %1033 = vmatprep.subr.mxu0 %v544
        %1034 = vmatpush2.msra.mxu0 %v543
        %1035 = vmatprep.subr.mxu0 %v534
        %1036 = vmatpush2.msra.mxu0 %v533
        %1037 = vmatprep.subr.mxu0 %v524
        %1038 = vmatpush2.msra.mxu0 %v523
        %1039 = vmatprep.subr.mxu0 %v514
        %1040 = vmatpush2.msra.mxu0 %v513
        %1041 = vmatprep.subr.mxu0 %v504
        %1042 = vmatpush2.msra.mxu0 %v503
        %1043 = vmatprep.subr.mxu0 %v494
        %1044 = vmatpush2.msra.mxu0 %v493
        %1045 = vmatprep.subr.mxu0 %v484
        %1046 = vmatpush2.msra.mxu0 %v483
        %1047 = vmatprep.subr.mxu0 %v474
        %1048 = vmatpush2.msra.mxu0 %v473
        %1049 = vmatprep.subr.mxu0 %v464
        %1050 = vmatpush2.msra.mxu0 %v463
        %1051 = vmatprep.subr.mxu0 %v454
        %1052 = vmatpush2.msra.mxu0 %v453
        %1053 = vmatprep.subr.mxu0 %v444
        %1054 = vmatpush2.msra.mxu0 %v443
        %1055 = vmatprep.subr.mxu0 %v434
        %1056 = vmatpush2.msra.mxu0 %v433
        %1057 = vmatprep.subr.mxu0 %v424
        %1058 = vmatpush2.msra.mxu0 %v423
        %1059 = vmatprep.mubr.f32.mxu0 %v623
        %1060 = vmatmul.mubr.f32.gmra.mxu0 %v591
        %v1061 = vpop.f32.mrf.mxu0
        %v1062 = vadd.f32 0.0, %v1061
        %v1063 = vpop.f32.mrf.mxu0
        %v1064 = vadd.f32 0.0, %v1063
        %1065 = vmatprep.mubr.f32.mxu0 %v624
        %1066 = vmatmul.mubr.f32.gmra.mxu0 %v592
        %v1067 = vpop.f32.mrf.mxu0
        %v1068 = vadd.f32 0.0, %v1067
        %v1069 = vpop.f32.mrf.mxu0
        %v1070 = vadd.f32 0.0, %v1069
        %1071 = vmatprep.mubr.f32.mxu0 %v625
        %1072 = vmatmul.mubr.f32.gmra.mxu0 %v593
        %v1073 = vpop.f32.mrf.mxu0
        %v1074 = vadd.f32 0.0, %v1073
        %v1075 = vpop.f32.mrf.mxu0
        %v1076 = vadd.f32 0.0, %v1075
        %1077 = vmatprep.mubr.f32.mxu0 %v626
        %1078 = vmatmul.mubr.f32.gmra.mxu0 %v594
        %v1079 = vpop.f32.mrf.mxu0
        %v1080 = vadd.f32 0.0, %v1079
        %v1081 = vpop.f32.mrf.mxu0
        %v1082 = vadd.f32 0.0, %v1081
        %1083 = vdwg.mxu0
        %v1084 = vld [vmem:[#allocation5] sm:$0xff]
        %v1085 = vld [vmem:[#allocation5 + $0x8] sm:$0x3]
        %v1088 = vlaneseq
        %v1089 = vshrl.u32 %v1088, 7
        %v1090 = vsub.s32 0, %v1089
        %v1091 = vrot.slane %v1084, %v1090
        %v1092 = vlaneseq
        %v1093 = vshrl.u32 %v1092, 7
        %v1094 = vsub.s32 1, %v1093
        %v1095 = vrot.slane %v1084, %v1094
        %v1096 = vlaneseq
        %v1097 = vshrl.u32 %v1096, 7
        %v1098 = vsub.s32 2, %v1097
        %v1099 = vrot.slane %v1084, %v1098
        %v1100 = vlaneseq
        %v1101 = vshrl.u32 %v1100, 7
        %v1102 = vsub.s32 3, %v1101
        %v1103 = vrot.slane %v1084, %v1102
        %v1104 = vlaneseq
        %v1105 = vshrl.u32 %v1104, 7
        %v1106 = vsub.s32 4, %v1105
        %v1107 = vrot.slane %v1084, %v1106
        %v1108 = vlaneseq
        %v1109 = vshrl.u32 %v1108, 7
        %v1110 = vsub.s32 5, %v1109
        %v1111 = vrot.slane %v1084, %v1110
        %v1112 = vlaneseq
        %v1113 = vshrl.u32 %v1112, 7
        %v1114 = vsub.s32 6, %v1113
        %v1115 = vrot.slane %v1084, %v1114
        %v1116 = vlaneseq
        %v1117 = vshrl.u32 %v1116, 7
        %v1118 = vsub.s32 7, %v1117
        %v1119 = vrot.slane %v1084, %v1118
        %v1120 = vlaneseq
        %v1121 = vshrl.u32 %v1120, 7
        %v1122 = vsub.s32 0, %v1121
        %v1123 = vrot.slane %v1085, %v1122
        %v1124 = vlaneseq
        %v1125 = vshrl.u32 %v1124, 7
        %v1126 = vsub.s32 1, %v1125
        %v1127 = vrot.slane %v1085, %v1126
        %v1138 = vmul.f32 %v706, %v1091
        %v1139 = vmul.f32 %v708, %v1095
        %v1140 = vmul.f32 %v795, %v1099
        %v1141 = vmul.f32 %v797, %v1103
        %v1142 = vmul.f32 %v884, %v1107
        %v1143 = vmul.f32 %v886, %v1111
        %v1144 = vmul.f32 %v973, %v1115
        %v1145 = vmul.f32 %v975, %v1119
        %v1146 = vmul.f32 %v1062, %v1123
        %v1147 = vmul.f32 %v1064, %v1127
        %v1148 = vmul.f32 %v712, %v1091
        %v1149 = vmul.f32 %v714, %v1095
        %v1150 = vmul.f32 %v801, %v1099
        %v1151 = vmul.f32 %v803, %v1103
        %v1152 = vmul.f32 %v890, %v1107
        %v1153 = vmul.f32 %v892, %v1111
        %v1154 = vmul.f32 %v979, %v1115
        %v1155 = vmul.f32 %v981, %v1119
        %v1156 = vmul.f32 %v1068, %v1123
        %v1157 = vmul.f32 %v1070, %v1127
        %v1158 = vmul.f32 %v718, %v1091
        %v1159 = vmul.f32 %v720, %v1095
        %v1160 = vmul.f32 %v807, %v1099
        %v1161 = vmul.f32 %v809, %v1103
        %v1162 = vmul.f32 %v896, %v1107
        %v1163 = vmul.f32 %v898, %v1111
        %v1164 = vmul.f32 %v985, %v1115
        %v1165 = vmul.f32 %v987, %v1119
        %v1166 = vmul.f32 %v1074, %v1123
        %v1167 = vmul.f32 %v1076, %v1127
        %v1168 = vmul.f32 %v724, %v1091
        %v1169 = vmul.f32 %v726, %v1095
        %v1170 = vmul.f32 %v813, %v1099
        %v1171 = vmul.f32 %v815, %v1103
        %v1172 = vmul.f32 %v902, %v1107
        %v1173 = vmul.f32 %v904, %v1111
        %v1174 = vmul.f32 %v991, %v1115
        %v1175 = vmul.f32 %v993, %v1119
        %v1176 = vmul.f32 %v1080, %v1123
        %v1177 = vmul.f32 %v1082, %v1127
        %1178 = vst [vmem:[%s213] sm:$0xff] %v1138
        %1179 = vst [vmem:[%s213 + $0x8] sm:$0xff] %v1139
        %1180 = vst [vmem:[%s213 + $0x10] sm:$0xff] %v1140
        %1181 = vst [vmem:[%s213 + $0x18] sm:$0xff] %v1141
        %1182 = vst [vmem:[%s213 + $0x20] sm:$0xff] %v1142
        %1183 = vst [vmem:[%s213 + $0x28] sm:$0xff] %v1143
        %1184 = vst [vmem:[%s213 + $0x30] sm:$0xff] %v1144
        %1185 = vst [vmem:[%s213 + $0x38] sm:$0xff] %v1145
        %1186 = vst [vmem:[%s213 + $0x40] sm:$0xff] %v1146
        %1187 = vst [vmem:[%s213 + $0x48] sm:$0xff] %v1147
        %1188 = vst [vmem:[%s213 + $0x50] sm:$0xff] %v1148
        %1189 = vst [vmem:[%s213 + $0x58] sm:$0xff] %v1149
        %1190 = vst [vmem:[%s213 + $0x60] sm:$0xff] %v1150
        %1191 = vst [vmem:[%s213 + $0x68] sm:$0xff] %v1151
        %1192 = vst [vmem:[%s213 + $0x70] sm:$0xff] %v1152
        %1193 = vst [vmem:[%s213 + $0x78] sm:$0xff] %v1153
        %1194 = vst [vmem:[%s213 + $0x80] sm:$0xff] %v1154
        %1195 = vst [vmem:[%s213 + $0x88] sm:$0xff] %v1155
        %1196 = vst [vmem:[%s213 + $0x90] sm:$0xff] %v1156
        %1197 = vst [vmem:[%s213 + $0x98] sm:$0xff] %v1157
        %1198 = vst [vmem:[%s213 + $0xa0] sm:$0xff] %v1158
        %1199 = vst [vmem:[%s213 + $0xa8] sm:$0xff] %v1159
        %1200 = vst [vmem:[%s213 + $0xb0] sm:$0xff] %v1160
        %1201 = vst [vmem:[%s213 + $0xb8] sm:$0xff] %v1161
        %1202 = vst [vmem:[%s213 + $0xc0] sm:$0xff] %v1162
        %1203 = vst [vmem:[%s213 + $0xc8] sm:$0xff] %v1163
        %1204 = vst [vmem:[%s213 + $0xd0] sm:$0xff] %v1164
        %1205 = vst [vmem:[%s213 + $0xd8] sm:$0xff] %v1165
        %1206 = vst [vmem:[%s213 + $0xe0] sm:$0xff] %v1166
        %1207 = vst [vmem:[%s213 + $0xe8] sm:$0xff] %v1167
        %1208 = vst [vmem:[%s213 + $0xf0] sm:$0xff] %v1168
        %1209 = vst [vmem:[%s213 + $0xf8] sm:$0xff] %v1169
        %1210 = vst [vmem:[%s213 + $0x100] sm:$0xff] %v1170
        %1211 = vst [vmem:[%s213 + $0x108] sm:$0xff] %v1171
        %1212 = vst [vmem:[%s213 + $0x110] sm:$0xff] %v1172
        %1213 = vst [vmem:[%s213 + $0x118] sm:$0xff] %v1173
        %1214 = vst [vmem:[%s213 + $0x120] sm:$0xff] %v1174
        %1215 = vst [vmem:[%s213 + $0x128] sm:$0xff] %v1175
        %1216 = vst [vmem:[%s213 + $0x130] sm:$0xff] %v1176
        %1217 = vst [vmem:[%s213 + $0x138] sm:$0xff] %v1177
        %s1218 = sand.u32 %s111, 1
        %s1219 = scalar_lea.sflag [#allocation4], %s1218
        %s1220 = sand.u32 %s111, 1
        %s1221 = smul.addr %s1220, 320
        %s1222 = scalar_lea.vmem [#allocation7], %s1221
        // Predicated region
        $region41: #{tpu_custom_call.1} parent=31 // pred_check
          %p1223 = pneg %p121
        $region42: #{tpu_custom_call.1} parent=31 // pred_check_branch
          %1225 = sbr.rel (%p1223) target = $region44
        $region43: #{tpu_custom_call.1} parent=31 // pred_region
          %s1226 = smul.u32 4, %s24
          %s1228 = ssub.s32 5120, 5120
          %1229 = vsyncadd %s1219, %s1228
          %s1230 = smul.addr %s1226, 10
          %s1231 = smul.addr %s23, 40
          %s1232 = sadd.s32 %s1230, %s1231
          %s1233 = smul.addr %s1232, 128
          %s1234 = scalar_lea.hbm %s3, %s1233
          %s1235 = sshll.u32 %s1222, 4
          %s1236 = int_to_ptr.vmem [resolvable:$true] %s1235
          %1241 = dma.vmem_to_hbm [thread:$0]  %s1236, 5120, %s1234, %s1219, 1280, 1280, 80
        $region44: #{tpu_custom_call.1} parent=31 // pred_fallthru
          _
      $region32: #{tpu_custom_call.1} parent=5 // pred_fallthru
        _
      %p1242 = scmp.le.s32.totalorder 2, %s14
      // Predicated region
      $region45: #{tpu_custom_call.1} parent=5 // pred_check
        %p1243 = pneg %p1242
      $region46: #{tpu_custom_call.1} parent=5 // pred_check_branch
        %1245 = sbr.rel (%p1243) target = $region48
      $region47: #{tpu_custom_call.1} parent=5 // pred_region
        %s1246 = ssub.s32 %s14, 2
        // Predicated region
        $region49: #{tpu_custom_call.1} parent=47 // pred_check
          %p1247 = pneg %p127
        $region50: #{tpu_custom_call.1} parent=47 // pred_check_branch
          %1249 = sbr.rel (%p1247) target = $region52
        $region51: #{tpu_custom_call.1} parent=47 // pred_region
          %s1250 = sand.u32 %s112, 1
          %s1251 = scalar_lea.sflag [#allocation4], %s1250
          %s1252 = sand.u32 %s112, 1
          %s1253 = smul.addr %s1252, 320
          %s1254 = scalar_lea.vmem [#allocation7], %s1253
          %1255 = dma.done %s1251, 5120
        $region52: #{tpu_custom_call.1} parent=47 // pred_fallthru
          _
      $region48: #{tpu_custom_call.1} parent=5 // pred_fallthru
        _
    $region6: #{tpu_custom_call.1} parent=1 // loop_footer
      %s18 = sadd.s32 1, %s14
    $region7: #{tpu_custom_call.1} parent=1 // loop_footer_branch
      %13 = sbr.rel target = $region3
    $region8: #{tpu_custom_call.1} parent=1 // loop_exit
      _
    %1256 = vsyncpa [#allocation3], 1
    %s1257 = scalar_lea.sflag [#allocation3], 1
    %1258 = vsyncpa %s1257, 1
    %1259 = vsyncpa [#allocation6], 1
    %1260 = vsyncpa [#allocation4], 1
    %s1261 = scalar_lea.sflag [#allocation4], 1
    %1262 = vsyncpa %s1261, 1

</llo_original>
